<compile_context>
chip_gen: v7x
topology: tpu7x:2x2x1
jax: 0.10.0
libtpu: 0.0.40
codegen_flags: <defaults>
</compile_context>

<pallas_src>
import jax
import jax.numpy as jnp
from jax.experimental import pallas as pl
from jax.experimental.pallas import tpu as pltpu


def _topomlp_kernel(x_ref, *refs):
    """Fused forward, transposed orientation: batch rides the lane axis.

    x_ref : (d, tn)  x^T tile (lane-dense: tn batch columns on the lane axis)
    w_refs: fused, pre-transposed weights; layer l is (d*dims[l+1], d*dims[l])
    o_ref : (d, tn)  output^T tile (row k == branch k, valid since dims[-1]==1)
    """
    w_refs = refs[:-1]
    o_ref = refs[-1]

    # layer 0: (d*d1, d) @ (d, tn) -> (d*d1, tn).  The small weight is the
    # streamed MXU operand; the batch tile fills the MXU output width.
    h = jnp.dot(w_refs[0][...], x_ref[...], preferred_element_type=jnp.float32)

    # hidden layers: sigmoid in f32 (tanh rides the EUP slot, no VPU divide,
    # no transient inf), then the block-diagonal fused weight (already
    # transposed host-side, so no in-kernel .T / transpose).
    for w_ref in w_refs[1:]:
        a = 0.5 * jnp.tanh(0.5 * h) + 0.5                      # == sigmoid(h), exact
        h = jnp.dot(w_ref[...], a.astype(w_ref.dtype),
                    preferred_element_type=jnp.float32)

    # final fused layer emits (d, tn): row k is branch k's scalar output.
    o_ref[...] = h.astype(o_ref.dtype)


def _fuse_weights_transposed(weights, dtype):
    """Host-side weight prep (done once, outside the kernel).

    Returns one fused, transposed weight per layer so the in-kernel compute is
        hT_{l+1} = fused_l @ hT_l,   hT_0 = x^T.

      layer 0 : (d*d1, d), row-block ith == W0[ith].T
                -> fused_0 @ x^T stacks all branches' layer-0 outputs row-wise.
      layer l : block-diagonal (d*dims[l+1], d*dims[l]) whose (k,k) block is
                W_l[k] in torch (out, in) layout, i.e. per-branch W_l[k] @ hT_k.
    """
    W0 = weights[0]                                    # (d, d, d1)
    d, _, d1 = W0.shape
    fused = [jnp.transpose(W0, (0, 2, 1)).reshape(d * d1, d).astype(dtype)]
    for W in weights[1:]:                              # (d, out, in)
        _, out_dim, in_dim = W.shape
        eye = jnp.eye(d, dtype=W.dtype)
        bd = jnp.einsum("koi,kl->koli", W, eye)        # (d, out, d, in); off-diag 0
        fused.append(bd.reshape(d * out_dim, d * in_dim).astype(dtype))
    # TODO(synk): for large d the block-diagonal is (d-1)/d structural zeros;
    # switch hidden layers to a per-branch stacked matmul (branch grid axis)
    # instead of dense block-diag when d*dims[i] grows beyond a few hundred.
    return fused


def topomlp_forward(x, weights, *, block_n=2048, matmul_dtype=jnp.bfloat16):
    """TopoMLP.forward.

    x       : (N, d) float array.
    weights : [W0 (d, d, d1), W1 (d, dims[2], dims[1]), ..., W_last (d, 1, dims[-2])]
              per-branch torch nn.Linear (out, in) layout.
    Returns : (N, d); column ith is branch ith's scalar output (dims[-1] == 1).
    """
    N, d = x.shape
    out_dtype = x.dtype
    assert weights[-1].shape[1] == 1, "TopoMLP requires dims[-1] == 1"

    fused = _fuse_weights_transposed(weights, matmul_dtype)

    # Batch tiling: the batch is the lane (last) axis of every x / out tile.
    LANE = 256                           # fills the MXU output width on v6e/v7x
    if N <= block_n:
        tn, n_pad = N, N                 # single full-extent tile (exempt from 128-divisibility)
    else:
        tn = max(LANE, (block_n // LANE) * LANE)
        n_pad = pl.cdiv(N, tn) * tn

    # Transpose (+ pad + cast) x on the host; XLA fuses this into one pass.
    xT = jnp.transpose(x)                # (d, N)
    if n_pad != N:
        xT = jnp.pad(xT, ((0, 0), (0, n_pad - N)))
    xT = xT.astype(matmul_dtype)

    in_specs = [pl.BlockSpec((d, tn), lambda i: (0, i))]
    for w in fused:
        # Constant index map -> fused weights are DMA'd once and stay VMEM-resident.
        in_specs.append(pl.BlockSpec(w.shape, lambda i: (0, 0)))
    out_spec = pl.BlockSpec((d, tn), lambda i: (0, i))

    # Advisory cost estimate so XLA schedules neighbors around the custom call.
    flops = sum(2 * w.shape[0] * w.shape[1] * n_pad for w in fused)
    transcendentals = sum(w.shape[1] for w in fused[1:]) * n_pad
    bytes_accessed = (xT.size * xT.dtype.itemsize
                      + n_pad * d * out_dtype.itemsize
                      + sum(int(w.size) * w.dtype.itemsize for w in fused))

    # Explicit scoped-VMEM limit: at least the 32 MiB default, below v7x's
    # 64 MiB physical (weights get double-buffered by default; headroom included).
    est = (2 * d * tn * (xT.dtype.itemsize + out_dtype.itemsize)
           + 2 * sum(int(w.size) * w.dtype.itemsize for w in fused)
           + 4 * max(w.shape[0] for w in fused) * tn * 4)
    vmem_limit = int(min(max(4 * est, 32 << 20), 48 << 20))

    outT = pl.pallas_call(
        _topomlp_kernel,
        out_shape=jax.ShapeDtypeStruct((d, n_pad), out_dtype),
        grid=(n_pad // tn,),
        in_specs=in_specs,
        out_specs=out_spec,
        cost_estimate=pl.CostEstimate(flops=int(flops),
                                      transcendentals=int(transcendentals),
                                      bytes_accessed=int(bytes_accessed)),
        compiler_params=pltpu.CompilerParams(
            # Batch axis is fully independent -> pipelined x/out tiles.
            # TODO(synk): on v7x switch this axis to pltpu.CORE_PARALLEL so both
            # TensorCores are used; kept "parallel" here for v5e/v6e safety.
            dimension_semantics=("parallel",),
            vmem_limit_bytes=vmem_limit,
        ),
    )(xT, *fused)

    out = jnp.transpose(outT)            # (n_pad, d): column ith == branch ith
    return out[:N] if n_pad != N else out


def _reference_forward(x, weights):
    """Plain-JAX reference mirroring TopoMLP.forward exactly (per-branch)."""
    d = x.shape[1]
    outs = []
    for ith in range(d):
        h = x @ weights[0][ith]
        for w in weights[1:]:
            h = jax.nn.sigmoid(h)
            h = h @ w[ith].T
        outs.append(h)
    return jnp.concatenate(outs, axis=1)


if __name__ == "__main__":
    # dims = [d, d1, d2, 1]  (TopoMLP requires dims[-1] == 1)
    dims = [4, 32, 16, 1]
    d, d1 = dims[0], dims[1]
    N = 640  # with block_n=256 this exercises a multi-step grid AND the ragged-tail padding path

    key = jax.random.PRNGKey(0)
    n_hidden = len(dims) - 2
    keys = jax.random.split(key, 2 + n_hidden)
    k_x, k_w0, k_hidden = keys[0], keys[1], keys[2:]

    x = jax.random.normal(k_x, (N, d), dtype=jnp.float32)

    # layer0: d*d independent Linear(1, d1) weights of shape (d1, 1); branch ith
    # stacks linear indices [d*ith, d*(ith+1)) then transposes, so
    #   W0[ith, j, :] == layerlist[0][d*ith + j].weight[:, 0].
    w0_flat = 0.5 * jax.random.normal(k_w0, (d * d, d1), dtype=jnp.float32)
    weights = [w0_flat.reshape(d, d, d1)]
    for li, kk in zip(range(1, len(dims) - 1), k_hidden):
        fan_in = dims[li]
        weights.append(jax.random.normal(kk, (d, dims[li + 1], dims[li]),
                                         dtype=jnp.float32) / jnp.sqrt(float(fan_in)))

    ref = _reference_forward(x, weights)

    # 1) exact path: f32 MXU operands, must match the f32 reference tightly.
    out_f32 = jax.block_until_ready(
        topomlp_forward(x, weights, block_n=256, matmul_dtype=jnp.float32))
    assert out_f32.shape == (N, d), f"bad output shape {out_f32.shape}"
    assert jnp.allclose(out_f32, ref, atol=1e-5, rtol=1e-5), "f32 kernel mismatch vs reference"

    # 2) fast path (v6e/v7x): bf16 MXU operands, f32 accumulation + f32 sigmoid;
    #    tolerance reflects bf16 input-quantization error only.
    out_bf16 = jax.block_until_ready(
        topomlp_forward(x, weights, block_n=256, matmul_dtype=jnp.bfloat16))
    assert out_bf16.shape == (N, d), f"bad output shape {out_bf16.shape}"
    assert jnp.allclose(out_bf16, ref, atol=5e-2, rtol=5e-2), "bf16 kernel mismatch vs reference"

    print("KERNEL_OK")
</pallas_src>

<mosaic_0001>
module attributes {stable_mosaic.version = 11 : i64} {
  func.func @_topomlp_kernel(%arg0: i32, %arg1: memref<4x256xf32, #tpu.memory_space<vmem>>, %arg2: memref<128x4xf32, #tpu.memory_space<vmem>>, %arg3: memref<64x128xf32, #tpu.memory_space<vmem>>, %arg4: memref<4x64xf32, #tpu.memory_space<vmem>>, %arg5: memref<4x256xf32, #tpu.memory_space<vmem>>) attributes {dimension_semantics = [#tpu.dimension_semantics<parallel>], iteration_bounds = array<i64: 3>, scalar_prefetch = 0 : i64, scratch_operands = 0 : i64, tpu.core_type = #tpu.core_type<tc>, window_params = [{transform_indices = @transform_0, window_bounds = array<i64: 4, 256>}, {pipeline_mode = #tpu.pipeline_mode<synchronous>, transform_indices = @transform_1, window_bounds = array<i64: 128, 4>}, {pipeline_mode = #tpu.pipeline_mode<synchronous>, transform_indices = @transform_2, window_bounds = array<i64: 64, 128>}, {pipeline_mode = #tpu.pipeline_mode<synchronous>, transform_indices = @transform_3, window_bounds = array<i64: 4, 64>}, {transform_indices = @transform_4, window_bounds = array<i64: 4, 256>}]} {
    %c0 = arith.constant 0 : index
    %c0_0 = arith.constant 0 : index
    %0 = vector.load %arg2[%c0, %c0_0] : memref<128x4xf32, #tpu.memory_space<vmem>>, vector<128x4xf32>
    %c0_1 = arith.constant 0 : index
    %c0_2 = arith.constant 0 : index
    %1 = vector.load %arg1[%c0_1, %c0_2] : memref<4x256xf32, #tpu.memory_space<vmem>>, vector<4x256xf32>
    %cst = arith.constant dense<0.000000e+00> : vector<128x256xf32>
    %2 = tpu.matmul %0, %1, %cst {dimension_numbers = #tpu.dot_dimension_numbers<[1], [0], [0], [1], [0, 0, 1, 1], [], []>} : vector<128x4xf32>, vector<4x256xf32>, vector<128x256xf32> -> vector<128x256xf32>
    %cst_3 = arith.constant 5.000000e-01 : f32
    %3 = vector.broadcast %cst_3 : f32 to vector<128x256xf32>
    %4 = arith.mulf %3, %2 : vector<128x256xf32>
    %5 = math.tanh %4 : vector<128x256xf32>
    %cst_4 = arith.constant 5.000000e-01 : f32
    %6 = vector.broadcast %cst_4 : f32 to vector<128x256xf32>
    %7 = arith.mulf %6, %5 : vector<128x256xf32>
    %cst_5 = arith.constant 5.000000e-01 : f32
    %8 = vector.broadcast %cst_5 : f32 to vector<128x256xf32>
    %9 = arith.addf %7, %8 : vector<128x256xf32>
    %c0_6 = arith.constant 0 : index
    %c0_7 = arith.constant 0 : index
    %10 = vector.load %arg3[%c0_6, %c0_7] : memref<64x128xf32, #tpu.memory_space<vmem>>, vector<64x128xf32>
    %cst_8 = arith.constant dense<0.000000e+00> : vector<64x256xf32>
    %11 = tpu.matmul %10, %9, %cst_8 {dimension_numbers = #tpu.dot_dimension_numbers<[1], [0], [0], [1], [0, 0, 1, 1], [], []>} : vector<64x128xf32>, vector<128x256xf32>, vector<64x256xf32> -> vector<64x256xf32>
    %cst_9 = arith.constant 5.000000e-01 : f32
    %12 = vector.broadcast %cst_9 : f32 to vector<64x256xf32>
    %13 = arith.mulf %12, %11 : vector<64x256xf32>
    %14 = math.tanh %13 : vector<64x256xf32>
    %cst_10 = arith.constant 5.000000e-01 : f32
    %15 = vector.broadcast %cst_10 : f32 to vector<64x256xf32>
    %16 = arith.mulf %15, %14 : vector<64x256xf32>
    %cst_11 = arith.constant 5.000000e-01 : f32
    %17 = vector.broadcast %cst_11 : f32 to vector<64x256xf32>
    %18 = arith.addf %16, %17 : vector<64x256xf32>
    %c0_12 = arith.constant 0 : index
    %c0_13 = arith.constant 0 : index
    %19 = vector.load %arg4[%c0_12, %c0_13] : memref<4x64xf32, #tpu.memory_space<vmem>>, vector<4x64xf32>
    %cst_14 = arith.constant dense<0.000000e+00> : vector<4x256xf32>
    %20 = tpu.matmul %19, %18, %cst_14 {dimension_numbers = #tpu.dot_dimension_numbers<[1], [0], [0], [1], [0, 0, 1, 1], [], []>} : vector<4x64xf32>, vector<64x256xf32>, vector<4x256xf32> -> vector<4x256xf32>
    %c0_15 = arith.constant 0 : index
    %c0_16 = arith.constant 0 : index
    %21 = vector.load %arg5[%c0_15, %c0_16] : memref<4x256xf32, #tpu.memory_space<vmem>>, vector<4x256xf32>
    tpu.vector_store %arg5[%c0_15, %c0_16], %20 {strides = array<i32>} : memref<4x256xf32, #tpu.memory_space<vmem>>, vector<4x256xf32>,
    return
  }
  func.func @transform_0(%arg0: i32) -> (i32, i32) {
    %c0_i32 = arith.constant 0 : i32
    %c0_i32_0 = arith.constant 0 : i32
    return %c0_i32, %arg0 : i32, i32
  }
  func.func @transform_1(%arg0: i32) -> (i32, i32) {
    %c0_i32 = arith.constant 0 : i32
    %c0_i32_0 = arith.constant 0 : i32
    %c0_i32_1 = arith.constant 0 : i32
    return %c0_i32, %c0_i32_0 : i32, i32
  }
  func.func @transform_2(%arg0: i32) -> (i32, i32) {
    %c0_i32 = arith.constant 0 : i32
    %c0_i32_0 = arith.constant 0 : i32
    %c0_i32_1 = arith.constant 0 : i32
    return %c0_i32, %c0_i32_0 : i32, i32
  }
  func.func @transform_3(%arg0: i32) -> (i32, i32) {
    %c0_i32 = arith.constant 0 : i32
    %c0_i32_0 = arith.constant 0 : i32
    %c0_i32_1 = arith.constant 0 : i32
    return %c0_i32, %c0_i32_0 : i32, i32
  }
  func.func @transform_4(%arg0: i32) -> (i32, i32) {
    %c0_i32 = arith.constant 0 : i32
    %c0_i32_0 = arith.constant 0 : i32
    return %c0_i32, %arg0 : i32, i32
  }
}

</mosaic_0001>

<llo_original>
// kernel: tpu_custom_call.1
$region0: #{tpu_custom_call.1}
  #allocation0 [shape = 'u32[]', space=smem, size = 0x4, offset = 0x4, fixed_abs, tag = 'smem constant byte address 0x4 - core index']
  #allocation1 [shape = 'u32[144,128]{1,0:T(1,128)}', space=vmem, size = 0x12000, scoped, tag = 'internal scratch']
  %s0 = inlined_call_operand.vmem [shape: f32[4,768], index: 0, kind: input, shape index: {}]
  %s1 = inlined_call_operand.vmem [shape: f32[128,4], index: 1, kind: input, shape index: {}]
  %s2 = inlined_call_operand.vmem [shape: f32[64,128], index: 2, kind: input, shape index: {}]
  %s3 = inlined_call_operand.vmem [shape: f32[4,64], index: 3, kind: input, shape index: {}]
  %s4 = inlined_call_operand.hbm [shape: f32[4,768], index: 4, kind: output, shape index: {}]
  %s5 = sld [smem:[#allocation0]]
  $region49: #{tpu_custom_call.1} parent=0
    _
  %s7 = ssub.s32 1, %s5
  %s8 = scalar_select 0, %s7, %s5
  $region1: #{tpu_custom_call.1} parent=0
    #allocation2 [shape = 'u8[8192]{0}', space=vmem, size = 0x2000, scoped, tag = 'output window, operand 0']
    #allocation3 [shape = 's32[2]{0}', space=sflag, size = 0x8, scoped, tag = 'scoped memory for tpu_custom_call.1']
    %9 = vsyncpa [#allocation3], 0
    %s10 = scalar_lea.sflag [#allocation3], 1
    %11 = vsyncpa %s10, 0
    loop: start=0, step=1, limit=5
    $region2: #{tpu_custom_call.1} parent=1 // loop_pre_header
      _
    $region3: #{tpu_custom_call.1} parent=1 // loop_header
      %s13 = sphi 0, %s17
      %p14 = scmp.ge.s32.totalorder %s13, 5
      %s23 = sphi 0, %s25
      %s26 = sphi 0, %s23
      %s27 = sphi 0, %s26
      %s43 = sphi 0, %s27
      %s47 = sphi 0, %s47
      %s49 = sphi 0, %s47
      %s50 = sphi 0, %s49
      %s64 = sphi 0, %s50
      %s68 = sphi 0, %s68
      %s70 = sphi 0, %s68
      %s71 = sphi 0, %s70
      %s85 = sphi 0, %s71
      %s89 = sphi 0, %s89
      %s91 = sphi 0, %s89
      %s92 = sphi 0, %s91
      %s106 = sphi 0, %s92
      %s112 = sphi 0, %s114
      %s115 = sphi 0, %s112
      %s116 = sphi 0, %s115
      %s132 = sphi 0, %s116
    $region4: #{tpu_custom_call.1} parent=1 // loop_header_branch
      %16 = sbr.rel (%p14) target = $region8
    $region5: #{tpu_custom_call.1} parent=1 // loop_body
      %s18 = ssub.s32 %s13, 1
      %s19 = ssub.s32 %s13, 2
      %s20 = sadd.s32 %s13, 1
      %s21 = ssub.s32 %s13, %s20
      %p22 = scmp.eq.s32.totalorder %s21, 0
      %s24 = sadd.s32 %s23, 1
      %s25 = scalar_select %p22, %s23, %s24
      %p28 = pneg %p22
      %p29 = scmp.eq.s32.totalorder %s13, 2
      %p30 = por %p28, %p29
      %p31 = scmp.ne.s32.totalorder %s23, %s26
      %p32 = scmp.eq.s32.totalorder %s13, 0
      %p33 = por %p31, %p32
      %p34 = scmp.ne.s32.totalorder %s23, %s26
      %p35 = scmp.eq.s32.totalorder %s18, 2
      %p36 = por %p34, %p35
      %p37 = scmp.ne.s32.totalorder %s26, %s27
      %p38 = scmp.eq.s32.totalorder %s18, 0
      %p39 = por %p37, %p38
      %p40 = scmp.ne.s32.totalorder %s26, %s27
      %p41 = scmp.eq.s32.totalorder %s19, 2
      %p42 = por %p40, %p41
      %p44 = scmp.ne.s32.totalorder %s27, %s43
      %p45 = scmp.eq.s32.totalorder %s19, 0
      %p46 = por %p44, %p45
      %s48 = sadd.s32 %s47, 1
      %p51 = scmp.eq.s32.totalorder %s13, 2
      %p52 = scmp.ne.s32.totalorder %s47, %s49
      %p53 = scmp.eq.s32.totalorder %s13, 0
      %p54 = por %p52, %p53
      %p55 = scmp.ne.s32.totalorder %s47, %s49
      %p56 = scmp.eq.s32.totalorder %s18, 2
      %p57 = por %p55, %p56
      %p58 = scmp.ne.s32.totalorder %s49, %s50
      %p59 = scmp.eq.s32.totalorder %s18, 0
      %p60 = por %p58, %p59
      %p61 = scmp.ne.s32.totalorder %s49, %s50
      %p62 = scmp.eq.s32.totalorder %s19, 2
      %p63 = por %p61, %p62
      %p65 = scmp.ne.s32.totalorder %s50, %s64
      %p66 = scmp.eq.s32.totalorder %s19, 0
      %p67 = por %p65, %p66
      %s69 = sadd.s32 %s68, 1
      %p72 = scmp.eq.s32.totalorder %s13, 2
      %p73 = scmp.ne.s32.totalorder %s68, %s70
      %p74 = scmp.eq.s32.totalorder %s13, 0
      %p75 = por %p73, %p74
      %p76 = scmp.ne.s32.totalorder %s68, %s70
      %p77 = scmp.eq.s32.totalorder %s18, 2
      %p78 = por %p76, %p77
      %p79 = scmp.ne.s32.totalorder %s70, %s71
      %p80 = scmp.eq.s32.totalorder %s18, 0
      %p81 = por %p79, %p80
      %p82 = scmp.ne.s32.totalorder %s70, %s71
      %p83 = scmp.eq.s32.totalorder %s19, 2
      %p84 = por %p82, %p83
      %p86 = scmp.ne.s32.totalorder %s71, %s85
      %p87 = scmp.eq.s32.totalorder %s19, 0
      %p88 = por %p86, %p87
      %s90 = sadd.s32 %s89, 1
      %p93 = scmp.eq.s32.totalorder %s13, 2
      %p94 = scmp.ne.s32.totalorder %s89, %s91
      %p95 = scmp.eq.s32.totalorder %s13, 0
      %p96 = por %p94, %p95
      %p97 = scmp.ne.s32.totalorder %s89, %s91
      %p98 = scmp.eq.s32.totalorder %s18, 2
      %p99 = por %p97, %p98
      %p100 = scmp.ne.s32.totalorder %s91, %s92
      %p101 = scmp.eq.s32.totalorder %s18, 0
      %p102 = por %p100, %p101
      %p103 = scmp.ne.s32.totalorder %s91, %s92
      %p104 = scmp.eq.s32.totalorder %s19, 2
      %p105 = por %p103, %p104
      %p107 = scmp.ne.s32.totalorder %s92, %s106
      %p108 = scmp.eq.s32.totalorder %s19, 0
      %p109 = por %p107, %p108
      %s110 = ssub.s32 %s13, %s20
      %p111 = scmp.eq.s32.totalorder %s110, 0
      %s113 = sadd.s32 %s112, 1
      %s114 = scalar_select %p111, %s112, %s113
      %p117 = pneg %p111
      %p118 = scmp.eq.s32.totalorder %s13, 2
      %p119 = por %p117, %p118
      %p120 = scmp.ne.s32.totalorder %s112, %s115
      %p121 = scmp.eq.s32.totalorder %s13, 0
      %p122 = por %p120, %p121
      %p123 = scmp.ne.s32.totalorder %s112, %s115
      %p124 = scmp.eq.s32.totalorder %s18, 2
      %p125 = por %p123, %p124
      %p126 = scmp.ne.s32.totalorder %s115, %s116
      %p127 = scmp.eq.s32.totalorder %s18, 0
      %p128 = por %p126, %p127
      %p129 = scmp.ne.s32.totalorder %s115, %s116
      %p130 = scmp.eq.s32.totalorder %s19, 2
      %p131 = por %p129, %p130
      %p133 = scmp.ne.s32.totalorder %s116, %s132
      %p134 = scmp.eq.s32.totalorder %s19, 0
      %p135 = por %p133, %p134
      %p136 = scmp.le.s32.totalorder 1, %s13
      %p137 = scmp.lt.s32.totalorder %s13, 4
      %p138 = pnand %p136, %p137
      %p139 = pneg %p138
      // Predicated region
      $region9: #{tpu_custom_call.1} parent=5 // pred_check
        _
      $region10: #{tpu_custom_call.1} parent=5 // pred_check_branch
        %141 = sbr.rel (%p138) target = $region12
      $region11: #{tpu_custom_call.1} parent=5 // pred_region
        %s142 = ssub.s32 %s13, 1
        // Predicated region
        $region13: #{tpu_custom_call.1} parent=11 // pred_check
          %p143 = pneg %p60
        $region14: #{tpu_custom_call.1} parent=11 // pred_check_branch
          %145 = sbr.rel (%p143) target = $region16
        $region15: #{tpu_custom_call.1} parent=11 // pred_region
          _
        $region16: #{tpu_custom_call.1} parent=11 // pred_fallthru
          _
        // Predicated region
        $region17: #{tpu_custom_call.1} parent=11 // pred_check
          %p146 = pneg %p81
        $region18: #{tpu_custom_call.1} parent=11 // pred_check_branch
          %148 = sbr.rel (%p146) target = $region20
        $region19: #{tpu_custom_call.1} parent=11 // pred_region
          _
        $region20: #{tpu_custom_call.1} parent=11 // pred_fallthru
          _
        // Predicated region
        $region21: #{tpu_custom_call.1} parent=11 // pred_check
          %p149 = pneg %p102
        $region22: #{tpu_custom_call.1} parent=11 // pred_check_branch
          %151 = sbr.rel (%p149) target = $region24
        $region23: #{tpu_custom_call.1} parent=11 // pred_region
          _
        $region24: #{tpu_custom_call.1} parent=11 // pred_fallthru
          _
      $region12: #{tpu_custom_call.1} parent=5 // pred_fallthru
        _
      %p152 = scmp.lt.s32.totalorder %s13, 3
      // Predicated region
      $region25: #{tpu_custom_call.1} parent=5 // pred_check
        %p153 = pneg %p152
      $region26: #{tpu_custom_call.1} parent=5 // pred_check_branch
        %155 = sbr.rel (%p153) target = $region28
      $region27: #{tpu_custom_call.1} parent=5 // pred_region
        // Predicated region
        $region29: #{tpu_custom_call.1} parent=27 // pred_check
          %p156 = pneg %p33
        $region30: #{tpu_custom_call.1} parent=27 // pred_check_branch
          %158 = sbr.rel (%p156) target = $region32
        $region31: #{tpu_custom_call.1} parent=27 // pred_region
          %s159 = smul.u32 2, %s13
          %p160 = scmp.lt.s32.totalorder %s159, 5
          %s161 = scalar_select %p160, %s159, 5
          %s162 = smul.addr %s161, 4
          %s163 = scalar_lea.vmem %s0, %s162
          %s164 = smul.u32 2, %s13
        $region32: #{tpu_custom_call.1} parent=27 // pred_fallthru
          _
      $region28: #{tpu_custom_call.1} parent=5 // pred_fallthru
        _
      %p165 = scmp.le.s32.totalorder 1, %s13
      %p166 = scmp.lt.s32.totalorder %s13, 4
      %p167 = pnand %p165, %p166
      %p168 = pneg %p167
      // Predicated region
      $region33: #{tpu_custom_call.1} parent=5 // pred_check
        _
      $region34: #{tpu_custom_call.1} parent=5 // pred_check_branch
        %170 = sbr.rel (%p167) target = $region36
      $region35: #{tpu_custom_call.1} parent=5 // pred_region
        %s171 = ssub.s32 %s13, 1
        %s172 = smul.u32 2, %s18
        %p173 = scmp.lt.s32.totalorder %s172, 5
        %s174 = scalar_select %p173, %s172, 5
        %s175 = smul.addr %s174, 4
        %s176 = scalar_lea.vmem %s0, %s175
        %p177 = pneg %p39
        %p178 = pneg %p36
        %p179 = pneg %p60
        %p180 = pneg %p57
        %p181 = pneg %p81
        %p182 = pneg %p78
        %p183 = pneg %p102
        %p184 = pneg %p99
        %p185 = pneg %p128
        %p186 = pneg %p125
        %s187 = sand.u32 %s115, 1
        %s188 = scalar_lea.sflag [#allocation3], %s187
        %s189 = sand.u32 %s115, 1
        %s190 = smul.addr %s189, 8
        %s191 = scalar_lea.vmem [#allocation2], %s190
        %s192 = smul.u32 2, %s18
        %p193 = scmp.lt.s32.totalorder %s192, 5
        %s194 = scalar_select %p193, %s192, 5
        %s195 = smul.addr %s194, 4
        %s196 = scalar_lea.vmem %s0, %s195
        %s197 = smul.u32 2, %s18
        %s198 = smul.u32 2, %s18
        %v199 = vld [vmem:[%s1] sm:$0xff]
        %v200 = vld [vmem:[%s1 + $0x8] sm:$0xff]
        %v201 = vld [vmem:[%s1 + $0x10] sm:$0xff]
        %v202 = vld [vmem:[%s1 + $0x18] sm:$0xff]
        %v203 = vld [vmem:[%s1 + $0x20] sm:$0xff]
        %v204 = vld [vmem:[%s1 + $0x28] sm:$0xff]
        %v205 = vld [vmem:[%s1 + $0x30] sm:$0xff]
        %v206 = vld [vmem:[%s1 + $0x38] sm:$0xff]
        %v207 = vld [vmem:[%s1 + $0x40] sm:$0xff]
        %v208 = vld [vmem:[%s1 + $0x48] sm:$0xff]
        %v209 = vld [vmem:[%s1 + $0x50] sm:$0xff]
        %v210 = vld [vmem:[%s1 + $0x58] sm:$0xff]
        %v211 = vld [vmem:[%s1 + $0x60] sm:$0xff]
        %v212 = vld [vmem:[%s1 + $0x68] sm:$0xff]
        %v213 = vld [vmem:[%s1 + $0x70] sm:$0xff]
        %v214 = vld [vmem:[%s1 + $0x78] sm:$0xff]
        %v215 = vld [vmem:[%s196] sm:$0xff]
        %v217 = vcombine.high %v215, %v215
        %vm218 = vcmask 31744
        %v220 = vsel %vm218, %v199, 0
        %v223 = vsel %vm218, %v200, 0
        %v226 = vsel %vm218, %v201, 0
        %v229 = vsel %vm218, %v202, 0
        %v232 = vsel %vm218, %v203, 0
        %v235 = vsel %vm218, %v204, 0
        %v238 = vsel %vm218, %v205, 0
        %v241 = vsel %vm218, %v206, 0
        %v244 = vsel %vm218, %v207, 0
        %v247 = vsel %vm218, %v208, 0
        %v250 = vsel %vm218, %v209, 0
        %v253 = vsel %vm218, %v210, 0
        %v256 = vsel %vm218, %v211, 0
        %v259 = vsel %vm218, %v212, 0
        %v262 = vsel %vm218, %v213, 0
        %v265 = vsel %vm218, %v214, 0
        %vm267 = vcmask 1043456
        %v268 = vsel %vm267, %v215, 0
        %v270 = vsel %vm267, %v217, 0
        %272 = vmatprep.subr.mxu0 %v270
        %273 = vmatpush1.msra.mxu0 %v268
        %274 = vmatprep.subr.mxu0 0.0
        %275 = vmatpush1.msra.mxu0 0.0
        %276 = vmatprep.subr.mxu0 0.0
        %277 = vmatpush1.msra.mxu0 0.0
        %278 = vmatprep.subr.mxu0 0.0
        %279 = vmatpush1.msra.mxu0 0.0
        %280 = vmatprep.subr.mxu0 0.0
        %281 = vmatpush1.msra.mxu0 0.0
        %282 = vmatprep.subr.mxu0 0.0
        %283 = vmatpush1.msra.mxu0 0.0
        %284 = vmatprep.subr.mxu0 0.0
        %285 = vmatpush1.msra.mxu0 0.0
        %286 = vmatprep.subr.mxu0 0.0
        %287 = vmatpush1.msra.mxu0 0.0
        %288 = vmatprep.subr.mxu0 0.0
        %289 = vmatpush1.msra.mxu0 0.0
        %290 = vmatprep.subr.mxu0 0.0
        %291 = vmatpush1.msra.mxu0 0.0
        %292 = vmatprep.subr.mxu0 0.0
        %293 = vmatpush1.msra.mxu0 0.0
        %294 = vmatprep.subr.mxu0 0.0
        %295 = vmatpush1.msra.mxu0 0.0
        %296 = vmatprep.subr.mxu0 0.0
        %297 = vmatpush1.msra.mxu0 0.0
        %298 = vmatprep.subr.mxu0 0.0
        %299 = vmatpush1.msra.mxu0 0.0
        %300 = vmatprep.subr.mxu0 0.0
        %301 = vmatpush1.msra.mxu0 0.0
        %302 = vmatprep.subr.mxu0 0.0
        %303 = vmatpush1.msra.mxu0 0.0
        %304 = vmatprep.subr.mxu0 0.0
        %305 = vmatpush1.msra.mxu0 0.0
        %306 = vmatprep.subr.mxu0 0.0
        %307 = vmatpush1.msra.mxu0 0.0
        %308 = vmatprep.subr.mxu0 0.0
        %309 = vmatpush1.msra.mxu0 0.0
        %310 = vmatprep.subr.mxu0 0.0
        %311 = vmatpush1.msra.mxu0 0.0
        %312 = vmatprep.subr.mxu0 0.0
        %313 = vmatpush1.msra.mxu0 0.0
        %314 = vmatprep.subr.mxu0 0.0
        %315 = vmatpush1.msra.mxu0 0.0
        %316 = vmatprep.subr.mxu0 0.0
        %317 = vmatpush1.msra.mxu0 0.0
        %318 = vmatprep.subr.mxu0 0.0
        %319 = vmatpush1.msra.mxu0 0.0
        %320 = vmatprep.subr.mxu0 0.0
        %321 = vmatpush1.msra.mxu0 0.0
        %322 = vmatprep.subr.mxu0 0.0
        %323 = vmatpush1.msra.mxu0 0.0
        %324 = vmatprep.subr.mxu0 0.0
        %325 = vmatpush1.msra.mxu0 0.0
        %326 = vmatprep.subr.mxu0 0.0
        %327 = vmatpush1.msra.mxu0 0.0
        %328 = vmatprep.subr.mxu0 0.0
        %329 = vmatpush1.msra.mxu0 0.0
        %330 = vmatprep.subr.mxu0 0.0
        %331 = vmatpush1.msra.mxu0 0.0
        %332 = vmatprep.subr.mxu0 0.0
        %333 = vmatpush1.msra.mxu0 0.0
        %334 = vmatprep.subr.mxu0 0.0
        %335 = vmatpush1.msra.mxu0 0.0
        %336 = vmatprep.mubr.f32.mxu0 0.0
        %337 = vmatmul.mubr.f32.gmra.mrb[0].mxu0 %v220
        %v338 = vpop.f32.mrb[0].mxu0
        %v339 = vadd.f32 0.0, %v338
        %v340 = vpop.f32.mrb[0].mxu0
        %v341 = vadd.f32 0.0, %v340
        %342 = vmatprep.mubr.f32.mxu0 0.0
        %343 = vmatmul.mubr.f32.gmra.mrb[0].mxu0 %v223
        %v344 = vpop.f32.mrb[0].mxu0
        %v345 = vadd.f32 0.0, %v344
        %v346 = vpop.f32.mrb[0].mxu0
        %v347 = vadd.f32 0.0, %v346
        %348 = vmatprep.mubr.f32.mxu0 0.0
        %349 = vmatmul.mubr.f32.gmra.mrb[0].mxu0 %v226
        %v350 = vpop.f32.mrb[0].mxu0
        %v351 = vadd.f32 0.0, %v350
        %v352 = vpop.f32.mrb[0].mxu0
        %v353 = vadd.f32 0.0, %v352
        %354 = vmatprep.mubr.f32.mxu0 0.0
        %355 = vmatmul.mubr.f32.gmra.mrb[0].mxu0 %v229
        %v356 = vpop.f32.mrb[0].mxu0
        %v357 = vadd.f32 0.0, %v356
        %v358 = vpop.f32.mrb[0].mxu0
        %v359 = vadd.f32 0.0, %v358
        %360 = vmatprep.mubr.f32.mxu0 0.0
        %361 = vmatmul.mubr.f32.gmra.mrb[0].mxu0 %v232
        %v362 = vpop.f32.mrb[0].mxu0
        %v363 = vadd.f32 0.0, %v362
        %v364 = vpop.f32.mrb[0].mxu0
        %v365 = vadd.f32 0.0, %v364
        %366 = vmatprep.mubr.f32.mxu0 0.0
        %367 = vmatmul.mubr.f32.gmra.mrb[0].mxu0 %v235
        %v368 = vpop.f32.mrb[0].mxu0
        %v369 = vadd.f32 0.0, %v368
        %v370 = vpop.f32.mrb[0].mxu0
        %v371 = vadd.f32 0.0, %v370
        %372 = vmatprep.mubr.f32.mxu0 0.0
        %373 = vmatmul.mubr.f32.gmra.mrb[0].mxu0 %v238
        %v374 = vpop.f32.mrb[0].mxu0
        %v375 = vadd.f32 0.0, %v374
        %v376 = vpop.f32.mrb[0].mxu0
        %v377 = vadd.f32 0.0, %v376
        %378 = vmatprep.mubr.f32.mxu0 0.0
        %379 = vmatmul.mubr.f32.gmra.mrb[0].mxu0 %v241
        %v380 = vpop.f32.mrb[0].mxu0
        %v381 = vadd.f32 0.0, %v380
        %v382 = vpop.f32.mrb[0].mxu0
        %v383 = vadd.f32 0.0, %v382
        %384 = vmatprep.mubr.f32.mxu0 0.0
        %385 = vmatmul.mubr.f32.gmra.mrb[0].mxu0 %v244
        %v386 = vpop.f32.mrb[0].mxu0
        %v387 = vadd.f32 0.0, %v386
        %v388 = vpop.f32.mrb[0].mxu0
        %v389 = vadd.f32 0.0, %v388
        %390 = vmatprep.mubr.f32.mxu0 0.0
        %391 = vmatmul.mubr.f32.gmra.mrb[0].mxu0 %v247
        %v392 = vpop.f32.mrb[0].mxu0
        %v393 = vadd.f32 0.0, %v392
        %v394 = vpop.f32.mrb[0].mxu0
        %v395 = vadd.f32 0.0, %v394
        %396 = vmatprep.mubr.f32.mxu0 0.0
        %397 = vmatmul.mubr.f32.gmra.mrb[0].mxu0 %v250
        %v398 = vpop.f32.mrb[0].mxu0
        %v399 = vadd.f32 0.0, %v398
        %v400 = vpop.f32.mrb[0].mxu0
        %v401 = vadd.f32 0.0, %v400
        %402 = vmatprep.mubr.f32.mxu0 0.0
        %403 = vmatmul.mubr.f32.gmra.mrb[0].mxu0 %v253
        %v404 = vpop.f32.mrb[0].mxu0
        %v405 = vadd.f32 0.0, %v404
        %v406 = vpop.f32.mrb[0].mxu0
        %v407 = vadd.f32 0.0, %v406
        %408 = vmatprep.mubr.f32.mxu0 0.0
        %409 = vmatmul.mubr.f32.gmra.mrb[0].mxu0 %v256
        %v410 = vpop.f32.mrb[0].mxu0
        %v411 = vadd.f32 0.0, %v410
        %v412 = vpop.f32.mrb[0].mxu0
        %v413 = vadd.f32 0.0, %v412
        %414 = vmatprep.mubr.f32.mxu0 0.0
        %415 = vmatmul.mubr.f32.gmra.mrb[0].mxu0 %v259
        %v416 = vpop.f32.mrb[0].mxu0
        %v417 = vadd.f32 0.0, %v416
        %v418 = vpop.f32.mrb[0].mxu0
        %v419 = vadd.f32 0.0, %v418
        %420 = vmatprep.mubr.f32.mxu0 0.0
        %421 = vmatmul.mubr.f32.gmra.mrb[0].mxu0 %v262
        %v422 = vpop.f32.mrb[0].mxu0
        %v423 = vadd.f32 0.0, %v422
        %v424 = vpop.f32.mrb[0].mxu0
        %v425 = vadd.f32 0.0, %v424
        %426 = vmatprep.mubr.f32.mxu0 0.0
        %427 = vmatmul.mubr.f32.gmra.mrb[0].mxu0 %v265
        %v428 = vpop.f32.mrb[0].mxu0
        %v429 = vadd.f32 0.0, %v428
        %v430 = vpop.f32.mrb[0].mxu0
        %v431 = vadd.f32 0.0, %v430
        %432 = vdwg.mxu0
        %v433 = vmul.f32 %v339, 0.5
        %v434 = vmul.f32 %v341, 0.5
        %v435 = vmul.f32 %v345, 0.5
        %v436 = vmul.f32 %v347, 0.5
        %v437 = vmul.f32 %v351, 0.5
        %v438 = vmul.f32 %v353, 0.5
        %v439 = vmul.f32 %v357, 0.5
        %v440 = vmul.f32 %v359, 0.5
        %v441 = vmul.f32 %v363, 0.5
        %v442 = vmul.f32 %v365, 0.5
        %v443 = vmul.f32 %v369, 0.5
        %v444 = vmul.f32 %v371, 0.5
        %v445 = vmul.f32 %v375, 0.5
        %v446 = vmul.f32 %v377, 0.5
        %v447 = vmul.f32 %v381, 0.5
        %v448 = vmul.f32 %v383, 0.5
        %v449 = vmul.f32 %v387, 0.5
        %v450 = vmul.f32 %v389, 0.5
        %v451 = vmul.f32 %v393, 0.5
        %v452 = vmul.f32 %v395, 0.5
        %v453 = vmul.f32 %v399, 0.5
        %v454 = vmul.f32 %v401, 0.5
        %v455 = vmul.f32 %v405, 0.5
        %v456 = vmul.f32 %v407, 0.5
        %v457 = vmul.f32 %v411, 0.5
        %v458 = vmul.f32 %v413, 0.5
        %v459 = vmul.f32 %v417, 0.5
        %v460 = vmul.f32 %v419, 0.5
        %v461 = vmul.f32 %v423, 0.5
        %v462 = vmul.f32 %v425, 0.5
        %v463 = vmul.f32 %v429, 0.5
        %v464 = vmul.f32 %v431, 0.5
        %v465 = vtanh.pop %v433
        %v466 = vtanh.pop %v434
        %v467 = vtanh.pop %v435
        %v468 = vtanh.pop %v436
        %v469 = vtanh.pop %v437
        %v470 = vtanh.pop %v438
        %v471 = vtanh.pop %v439
        %v472 = vtanh.pop %v440
        %v473 = vtanh.pop %v441
        %v474 = vtanh.pop %v442
        %v475 = vtanh.pop %v443
        %v476 = vtanh.pop %v444
        %v477 = vtanh.pop %v445
        %v478 = vtanh.pop %v446
        %v479 = vtanh.pop %v447
        %v480 = vtanh.pop %v448
        %v481 = vtanh.pop %v449
        %v482 = vtanh.pop %v450
        %v483 = vtanh.pop %v451
        %v484 = vtanh.pop %v452
        %v485 = vtanh.pop %v453
        %v486 = vtanh.pop %v454
        %v487 = vtanh.pop %v455
        %v488 = vtanh.pop %v456
        %v489 = vtanh.pop %v457
        %v490 = vtanh.pop %v458
        %v491 = vtanh.pop %v459
        %v492 = vtanh.pop %v460
        %v493 = vtanh.pop %v461
        %v494 = vtanh.pop %v462
        %v495 = vtanh.pop %v463
        %v496 = vtanh.pop %v464
        %v497 = vmul.f32 %v465, 0.5
        %v498 = vmul.f32 %v466, 0.5
        %v499 = vmul.f32 %v467, 0.5
        %v500 = vmul.f32 %v468, 0.5
        %v501 = vmul.f32 %v469, 0.5
        %v502 = vmul.f32 %v470, 0.5
        %v503 = vmul.f32 %v471, 0.5
        %v504 = vmul.f32 %v472, 0.5
        %v505 = vmul.f32 %v473, 0.5
        %v506 = vmul.f32 %v474, 0.5
        %v507 = vmul.f32 %v475, 0.5
        %v508 = vmul.f32 %v476, 0.5
        %v509 = vmul.f32 %v477, 0.5
        %v510 = vmul.f32 %v478, 0.5
        %v511 = vmul.f32 %v479, 0.5
        %v512 = vmul.f32 %v480, 0.5
        %v513 = vmul.f32 %v481, 0.5
        %v514 = vmul.f32 %v482, 0.5
        %v515 = vmul.f32 %v483, 0.5
        %v516 = vmul.f32 %v484, 0.5
        %v517 = vmul.f32 %v485, 0.5
        %v518 = vmul.f32 %v486, 0.5
        %v519 = vmul.f32 %v487, 0.5
        %v520 = vmul.f32 %v488, 0.5
        %v521 = vmul.f32 %v489, 0.5
        %v522 = vmul.f32 %v490, 0.5
        %v523 = vmul.f32 %v491, 0.5
        %v524 = vmul.f32 %v492, 0.5
        %v525 = vmul.f32 %v493, 0.5
        %v526 = vmul.f32 %v494, 0.5
        %v527 = vmul.f32 %v495, 0.5
        %v528 = vmul.f32 %v496, 0.5
        %v529 = vadd.f32 %v497, 0.5
        %v530 = vadd.f32 %v498, 0.5
        %v531 = vadd.f32 %v499, 0.5
        %v532 = vadd.f32 %v500, 0.5
        %v533 = vadd.f32 %v501, 0.5
        %v534 = vadd.f32 %v502, 0.5
        %v535 = vadd.f32 %v503, 0.5
        %v536 = vadd.f32 %v504, 0.5
        %v537 = vadd.f32 %v505, 0.5
        %v538 = vadd.f32 %v506, 0.5
        %v539 = vadd.f32 %v507, 0.5
        %v540 = vadd.f32 %v508, 0.5
        %v541 = vadd.f32 %v509, 0.5
        %v542 = vadd.f32 %v510, 0.5
        %v543 = vadd.f32 %v511, 0.5
        %v544 = vadd.f32 %v512, 0.5
        %v545 = vadd.f32 %v513, 0.5
        %v546 = vadd.f32 %v514, 0.5
        %v547 = vadd.f32 %v515, 0.5
        %v548 = vadd.f32 %v516, 0.5
        %v549 = vadd.f32 %v517, 0.5
        %v550 = vadd.f32 %v518, 0.5
        %v551 = vadd.f32 %v519, 0.5
        %v552 = vadd.f32 %v520, 0.5
        %v553 = vadd.f32 %v521, 0.5
        %v554 = vadd.f32 %v522, 0.5
        %v555 = vadd.f32 %v523, 0.5
        %v556 = vadd.f32 %v524, 0.5
        %v557 = vadd.f32 %v525, 0.5
        %v558 = vadd.f32 %v526, 0.5
        %v559 = vadd.f32 %v527, 0.5
        %v560 = vadd.f32 %v528, 0.5
        %v561 = vld [vmem:[%s2] sm:$0xff]
        %v562 = vld [vmem:[%s2 + $0x8] sm:$0xff]
        %v563 = vld [vmem:[%s2 + $0x10] sm:$0xff]
        %v564 = vld [vmem:[%s2 + $0x18] sm:$0xff]
        %v565 = vld [vmem:[%s2 + $0x20] sm:$0xff]
        %v566 = vld [vmem:[%s2 + $0x28] sm:$0xff]
        %v567 = vld [vmem:[%s2 + $0x30] sm:$0xff]
        %v568 = vld [vmem:[%s2 + $0x38] sm:$0xff]
        %569 = vmatprep.subr.mxu0 %v530
        %570 = vmatpush1.msra.mxu0 %v529
        %571 = vmatprep.subr.mxu0 %v532
        %572 = vmatpush1.msra.mxu0 %v531
        %573 = vmatprep.subr.mxu0 %v534
        %574 = vmatpush1.msra.mxu0 %v533
        %575 = vmatprep.subr.mxu0 %v536
        %576 = vmatpush1.msra.mxu0 %v535
        %577 = vmatprep.subr.mxu0 %v538
        %578 = vmatpush1.msra.mxu0 %v537
        %579 = vmatprep.subr.mxu0 %v540
        %580 = vmatpush1.msra.mxu0 %v539
        %581 = vmatprep.subr.mxu0 %v542
        %582 = vmatpush1.msra.mxu0 %v541
        %583 = vmatprep.subr.mxu0 %v544
        %584 = vmatpush1.msra.mxu0 %v543
        %585 = vmatprep.subr.mxu0 %v546
        %586 = vmatpush1.msra.mxu0 %v545
        %587 = vmatprep.subr.mxu0 %v548
        %588 = vmatpush1.msra.mxu0 %v547
        %589 = vmatprep.subr.mxu0 %v550
        %590 = vmatpush1.msra.mxu0 %v549
        %591 = vmatprep.subr.mxu0 %v552
        %592 = vmatpush1.msra.mxu0 %v551
        %593 = vmatprep.subr.mxu0 %v554
        %594 = vmatpush1.msra.mxu0 %v553
        %595 = vmatprep.subr.mxu0 %v556
        %596 = vmatpush1.msra.mxu0 %v555
        %597 = vmatprep.subr.mxu0 %v558
        %598 = vmatpush1.msra.mxu0 %v557
        %599 = vmatprep.subr.mxu0 %v560
        %600 = vmatpush1.msra.mxu0 %v559
        %601 = vmatprep.subr.mxu0 0.0
        %602 = vmatpush1.msra.mxu0 0.0
        %603 = vmatprep.subr.mxu0 0.0
        %604 = vmatpush1.msra.mxu0 0.0
        %605 = vmatprep.subr.mxu0 0.0
        %606 = vmatpush1.msra.mxu0 0.0
        %607 = vmatprep.subr.mxu0 0.0
        %608 = vmatpush1.msra.mxu0 0.0
        %609 = vmatprep.subr.mxu0 0.0
        %610 = vmatpush1.msra.mxu0 0.0
        %611 = vmatprep.subr.mxu0 0.0
        %612 = vmatpush1.msra.mxu0 0.0
        %613 = vmatprep.subr.mxu0 0.0
        %614 = vmatpush1.msra.mxu0 0.0
        %615 = vmatprep.subr.mxu0 0.0
        %616 = vmatpush1.msra.mxu0 0.0
        %617 = vmatprep.subr.mxu0 0.0
        %618 = vmatpush1.msra.mxu0 0.0
        %619 = vmatprep.subr.mxu0 0.0
        %620 = vmatpush1.msra.mxu0 0.0
        %621 = vmatprep.subr.mxu0 0.0
        %622 = vmatpush1.msra.mxu0 0.0
        %623 = vmatprep.subr.mxu0 0.0
        %624 = vmatpush1.msra.mxu0 0.0
        %625 = vmatprep.subr.mxu0 0.0
        %626 = vmatpush1.msra.mxu0 0.0
        %627 = vmatprep.subr.mxu0 0.0
        %628 = vmatpush1.msra.mxu0 0.0
        %629 = vmatprep.subr.mxu0 0.0
        %630 = vmatpush1.msra.mxu0 0.0
        %631 = vmatprep.subr.mxu0 0.0
        %632 = vmatpush1.msra.mxu0 0.0
        %633 = vmatprep.mubr.f32.mxu0 0.0
        %634 = vmatmul.mubr.f32.gmra.mrb[0].mxu0 %v561
        %v635 = vpop.f32.mrb[0].mxu0
        %v636 = vadd.f32 0.0, %v635
        %v637 = vpop.f32.mrb[0].mxu0
        %v638 = vadd.f32 0.0, %v637
        %639 = vmatprep.mubr.f32.mxu0 0.0
        %640 = vmatmul.mubr.f32.gmra.mrb[0].mxu0 %v562
        %v641 = vpop.f32.mrb[0].mxu0
        %v642 = vadd.f32 0.0, %v641
        %v643 = vpop.f32.mrb[0].mxu0
        %v644 = vadd.f32 0.0, %v643
        %645 = vmatprep.mubr.f32.mxu0 0.0
        %646 = vmatmul.mubr.f32.gmra.mrb[0].mxu0 %v563
        %v647 = vpop.f32.mrb[0].mxu0
        %v648 = vadd.f32 0.0, %v647
        %v649 = vpop.f32.mrb[0].mxu0
        %v650 = vadd.f32 0.0, %v649
        %651 = vmatprep.mubr.f32.mxu0 0.0
        %652 = vmatmul.mubr.f32.gmra.mrb[0].mxu0 %v564
        %v653 = vpop.f32.mrb[0].mxu0
        %v654 = vadd.f32 0.0, %v653
        %v655 = vpop.f32.mrb[0].mxu0
        %v656 = vadd.f32 0.0, %v655
        %657 = vmatprep.mubr.f32.mxu0 0.0
        %658 = vmatmul.mubr.f32.gmra.mrb[0].mxu0 %v565
        %v659 = vpop.f32.mrb[0].mxu0
        %v660 = vadd.f32 0.0, %v659
        %v661 = vpop.f32.mrb[0].mxu0
        %v662 = vadd.f32 0.0, %v661
        %663 = vmatprep.mubr.f32.mxu0 0.0
        %664 = vmatmul.mubr.f32.gmra.mrb[0].mxu0 %v566
        %v665 = vpop.f32.mrb[0].mxu0
        %v666 = vadd.f32 0.0, %v665
        %v667 = vpop.f32.mrb[0].mxu0
        %v668 = vadd.f32 0.0, %v667
        %669 = vmatprep.mubr.f32.mxu0 0.0
        %670 = vmatmul.mubr.f32.gmra.mrb[0].mxu0 %v567
        %v671 = vpop.f32.mrb[0].mxu0
        %v672 = vadd.f32 0.0, %v671
        %v673 = vpop.f32.mrb[0].mxu0
        %v674 = vadd.f32 0.0, %v673
        %675 = vmatprep.mubr.f32.mxu0 0.0
        %676 = vmatmul.mubr.f32.gmra.mrb[0].mxu0 %v568
        %v677 = vpop.f32.mrb[0].mxu0
        %v678 = vadd.f32 0.0, %v677
        %v679 = vpop.f32.mrb[0].mxu0
        %v680 = vadd.f32 0.0, %v679
        %681 = vdwg.mxu0
        %v682 = vmul.f32 %v636, 0.5
        %v683 = vmul.f32 %v638, 0.5
        %v684 = vmul.f32 %v642, 0.5
        %v685 = vmul.f32 %v644, 0.5
        %v686 = vmul.f32 %v648, 0.5
        %v687 = vmul.f32 %v650, 0.5
        %v688 = vmul.f32 %v654, 0.5
        %v689 = vmul.f32 %v656, 0.5
        %v690 = vmul.f32 %v660, 0.5
        %v691 = vmul.f32 %v662, 0.5
        %v692 = vmul.f32 %v666, 0.5
        %v693 = vmul.f32 %v668, 0.5
        %v694 = vmul.f32 %v672, 0.5
        %v695 = vmul.f32 %v674, 0.5
        %v696 = vmul.f32 %v678, 0.5
        %v697 = vmul.f32 %v680, 0.5
        %v698 = vtanh.pop %v682
        %v699 = vtanh.pop %v683
        %v700 = vtanh.pop %v684
        %v701 = vtanh.pop %v685
        %v702 = vtanh.pop %v686
        %v703 = vtanh.pop %v687
        %v704 = vtanh.pop %v688
        %v705 = vtanh.pop %v689
        %v706 = vtanh.pop %v690
        %v707 = vtanh.pop %v691
        %v708 = vtanh.pop %v692
        %v709 = vtanh.pop %v693
        %v710 = vtanh.pop %v694
        %v711 = vtanh.pop %v695
        %v712 = vtanh.pop %v696
        %v713 = vtanh.pop %v697
        %v714 = vmul.f32 %v698, 0.5
        %v715 = vmul.f32 %v699, 0.5
        %v716 = vmul.f32 %v700, 0.5
        %v717 = vmul.f32 %v701, 0.5
        %v718 = vmul.f32 %v702, 0.5
        %v719 = vmul.f32 %v703, 0.5
        %v720 = vmul.f32 %v704, 0.5
        %v721 = vmul.f32 %v705, 0.5
        %v722 = vmul.f32 %v706, 0.5
        %v723 = vmul.f32 %v707, 0.5
        %v724 = vmul.f32 %v708, 0.5
        %v725 = vmul.f32 %v709, 0.5
        %v726 = vmul.f32 %v710, 0.5
        %v727 = vmul.f32 %v711, 0.5
        %v728 = vmul.f32 %v712, 0.5
        %v729 = vmul.f32 %v713, 0.5
        %v730 = vadd.f32 %v714, 0.5
        %v731 = vadd.f32 %v715, 0.5
        %v732 = vadd.f32 %v716, 0.5
        %v733 = vadd.f32 %v717, 0.5
        %v734 = vadd.f32 %v718, 0.5
        %v735 = vadd.f32 %v719, 0.5
        %v736 = vadd.f32 %v720, 0.5
        %v737 = vadd.f32 %v721, 0.5
        %v738 = vadd.f32 %v722, 0.5
        %v739 = vadd.f32 %v723, 0.5
        %v740 = vadd.f32 %v724, 0.5
        %v741 = vadd.f32 %v725, 0.5
        %v742 = vadd.f32 %v726, 0.5
        %v743 = vadd.f32 %v727, 0.5
        %v744 = vadd.f32 %v728, 0.5
        %v745 = vadd.f32 %v729, 0.5
        %v746 = vld [vmem:[%s3] sm:$0xf]
        %vm747 = vcmask 523264
        %v749 = vsel %vm747, %v746, 0
        %751 = vmatprep.subr.mxu0 %v731
        %752 = vmatpush1.msra.mxu0 %v730
        %753 = vmatprep.subr.mxu0 %v733
        %754 = vmatpush1.msra.mxu0 %v732
        %755 = vmatprep.subr.mxu0 %v735
        %756 = vmatpush1.msra.mxu0 %v734
        %757 = vmatprep.subr.mxu0 %v737
        %758 = vmatpush1.msra.mxu0 %v736
        %759 = vmatprep.subr.mxu0 %v739
        %760 = vmatpush1.msra.mxu0 %v738
        %761 = vmatprep.subr.mxu0 %v741
        %762 = vmatpush1.msra.mxu0 %v740
        %763 = vmatprep.subr.mxu0 %v743
        %764 = vmatpush1.msra.mxu0 %v742
        %765 = vmatprep.subr.mxu0 %v745
        %766 = vmatpush1.msra.mxu0 %v744
        %767 = vmatprep.subr.mxu0 0.0
        %768 = vmatpush1.msra.mxu0 0.0
        %769 = vmatprep.subr.mxu0 0.0
        %770 = vmatpush1.msra.mxu0 0.0
        %771 = vmatprep.subr.mxu0 0.0
        %772 = vmatpush1.msra.mxu0 0.0
        %773 = vmatprep.subr.mxu0 0.0
        %774 = vmatpush1.msra.mxu0 0.0
        %775 = vmatprep.subr.mxu0 0.0
        %776 = vmatpush1.msra.mxu0 0.0
        %777 = vmatprep.subr.mxu0 0.0
        %778 = vmatpush1.msra.mxu0 0.0
        %779 = vmatprep.subr.mxu0 0.0
        %780 = vmatpush1.msra.mxu0 0.0
        %781 = vmatprep.subr.mxu0 0.0
        %782 = vmatpush1.msra.mxu0 0.0
        %783 = vmatprep.subr.mxu0 0.0
        %784 = vmatpush1.msra.mxu0 0.0
        %785 = vmatprep.subr.mxu0 0.0
        %786 = vmatpush1.msra.mxu0 0.0
        %787 = vmatprep.subr.mxu0 0.0
        %788 = vmatpush1.msra.mxu0 0.0
        %789 = vmatprep.subr.mxu0 0.0
        %790 = vmatpush1.msra.mxu0 0.0
        %791 = vmatprep.subr.mxu0 0.0
        %792 = vmatpush1.msra.mxu0 0.0
        %793 = vmatprep.subr.mxu0 0.0
        %794 = vmatpush1.msra.mxu0 0.0
        %795 = vmatprep.subr.mxu0 0.0
        %796 = vmatpush1.msra.mxu0 0.0
        %797 = vmatprep.subr.mxu0 0.0
        %798 = vmatpush1.msra.mxu0 0.0
        %799 = vmatprep.subr.mxu0 0.0
        %800 = vmatpush1.msra.mxu0 0.0
        %801 = vmatprep.subr.mxu0 0.0
        %802 = vmatpush1.msra.mxu0 0.0
        %803 = vmatprep.subr.mxu0 0.0
        %804 = vmatpush1.msra.mxu0 0.0
        %805 = vmatprep.subr.mxu0 0.0
        %806 = vmatpush1.msra.mxu0 0.0
        %807 = vmatprep.subr.mxu0 0.0
        %808 = vmatpush1.msra.mxu0 0.0
        %809 = vmatprep.subr.mxu0 0.0
        %810 = vmatpush1.msra.mxu0 0.0
        %811 = vmatprep.subr.mxu0 0.0
        %812 = vmatpush1.msra.mxu0 0.0
        %813 = vmatprep.subr.mxu0 0.0
        %814 = vmatpush1.msra.mxu0 0.0
        %815 = vmatprep.mubr.f32.mxu0 0.0
        %816 = vmatmul.mubr.f32.gmra.mrb[0].mxu0 %v749
        %v817 = vpop.f32.mrb[0].mxu0
        %v818 = vadd.f32 0.0, %v817
        %v819 = vpop.f32.mrb[0].mxu0
        %v820 = vadd.f32 0.0, %v819
        %821 = vdwg.mxu0
        %v824 = vcombine.low %v818, %v820
        %826 = vst [vmem:[%s191] sm:$0xff] %v824
        %s827 = sand.u32 %s115, 1
        %s828 = scalar_lea.sflag [#allocation3], %s827
        %s829 = sand.u32 %s115, 1
        %s830 = smul.addr %s829, 8
        %s831 = scalar_lea.vmem [#allocation2], %s830
        // Predicated region
        $region37: #{tpu_custom_call.1} parent=35 // pred_check
          %p832 = pneg %p125
        $region38: #{tpu_custom_call.1} parent=35 // pred_check_branch
          %834 = sbr.rel (%p832) target = $region40
        $region39: #{tpu_custom_call.1} parent=35 // pred_region
          %s835 = smul.u32 2, %s18
          %s837 = ssub.s32 128, 128
          %838 = vsyncadd %s828, %s837
          %s839 = smul.addr %s835, 64
          %s840 = scalar_lea.hbm %s4, %s839
          %s842 = sshll.u32 %s831, 4
          %s843 = int_to_ptr.vmem [resolvable:$true] %s842
          %845 = dma.vmem_to_hbm [thread:$0]  %s843, 128, %s840, %s828
        $region40: #{tpu_custom_call.1} parent=35 // pred_fallthru
          _
      $region36: #{tpu_custom_call.1} parent=5 // pred_fallthru
        _
      %p846 = scmp.le.s32.totalorder 2, %s13
      // Predicated region
      $region41: #{tpu_custom_call.1} parent=5 // pred_check
        %p847 = pneg %p846
      $region42: #{tpu_custom_call.1} parent=5 // pred_check_branch
        %849 = sbr.rel (%p847) target = $region44
      $region43: #{tpu_custom_call.1} parent=5 // pred_region
        %s850 = ssub.s32 %s13, 2
        // Predicated region
        $region45: #{tpu_custom_call.1} parent=43 // pred_check
          %p851 = pneg %p131
        $region46: #{tpu_custom_call.1} parent=43 // pred_check_branch
          %853 = sbr.rel (%p851) target = $region48
        $region47: #{tpu_custom_call.1} parent=43 // pred_region
          %s854 = sand.u32 %s116, 1
          %s855 = scalar_lea.sflag [#allocation3], %s854
          %s856 = sand.u32 %s116, 1
          %s857 = smul.addr %s856, 8
          %s858 = scalar_lea.vmem [#allocation2], %s857
          %859 = dma.done %s855, 128
        $region48: #{tpu_custom_call.1} parent=43 // pred_fallthru
          _
      $region44: #{tpu_custom_call.1} parent=5 // pred_fallthru
        _
    $region6: #{tpu_custom_call.1} parent=1 // loop_footer
      %s17 = sadd.s32 1, %s13
    $region7: #{tpu_custom_call.1} parent=1 // loop_footer_branch
      %12 = sbr.rel target = $region3
    $region8: #{tpu_custom_call.1} parent=1 // loop_exit
      _
    %860 = vsyncpa [#allocation3], 1
    %s861 = scalar_lea.sflag [#allocation3], 1
    %862 = vsyncpa %s861, 1

</llo_original>
